<compile_context>
chip_gen: v5e
topology: v5e:2x2
jax: 0.10.0
libtpu: 0.0.40
codegen_flags: <defaults>
</compile_context>

<pallas_src>
import functools

import jax
import jax.numpy as jnp
from jax.experimental import pallas as pl
from jax.experimental.pallas import tpu as pltpu


def _round_up(n, m):
    return (n + m - 1) // m * m


# ---------------------------------------------------------------------------
# Pallas kernels
# ---------------------------------------------------------------------------
def _matmul_bias_kernel(a_ref, b_ref, bias_ref, *refs, relu, with_stats):
    """bf16 x bf16 tiled matmul, fp32 accumulator, fused bias (+ReLU) epilogue.

    When with_stats=True the epilogue also emits per-channel sums and
    sums-of-squares of the (pre-bias) accumulator, so BN batch statistics can
    be formed in JAX without re-reading the conv output from HBM.
    """
    if with_stats:
        o_ref, sum_ref, sq_ref, acc_ref = refs
    else:
        o_ref, acc_ref = refs
        sum_ref = sq_ref = None

    @pl.when(pl.program_id(2) == 0)
    def _():
        acc_ref[...] = jnp.zeros_like(acc_ref)

    acc_ref[...] += jnp.dot(a_ref[...], b_ref[...],
                            preferred_element_type=jnp.float32)

    @pl.when(pl.program_id(2) == pl.num_programs(2) - 1)
    def _():
        acc = acc_ref[...]
        if with_stats:
            colsum = jnp.sum(acc, axis=0, keepdims=True)        # (1, tn)
            colsq = jnp.sum(acc * acc, axis=0, keepdims=True)   # (1, tn)
            sum_ref[...] = jnp.broadcast_to(colsum[None], sum_ref.shape)
            sq_ref[...] = jnp.broadcast_to(colsq[None], sq_ref.shape)
        out = acc + bias_ref[...]
        if relu:
            out = jnp.maximum(out, 0.0)
        o_ref[...] = out.astype(o_ref.dtype)


def _bn_lrelu_kernel(x_ref, scale_ref, shift_ref, o_ref):
    """Fused (folded) BatchNorm affine + LeakyReLU(0.2); f32 compute, bf16 I/O."""
    y = x_ref[...].astype(jnp.float32) * scale_ref[...] + shift_ref[...]
    o_ref[...] = jnp.where(y >= 0.0, y, 0.2 * y).astype(o_ref.dtype)


# ---------------------------------------------------------------------------
# Wrappers
# ---------------------------------------------------------------------------
def matmul_bias(a, b, bias, *, relu=False, with_stats=False,
                out_dtype=jnp.bfloat16):
    """a: (M, K), b: (K, N), bias: (N,). MXU matmul in bf16, fp32 accumulate."""
    M, K = a.shape
    Kb, Nn = b.shape
    assert K == Kb

    # K tile: largest multiple of 128 (<= 512) dividing the 128-padded K, so
    # tiny-K layers (initial: K=108 -> 128) are not blown up to 512.
    Kp = _round_up(K, 128)
    tk = 128
    for cand in (512, 384, 256, 128):
        if Kp % cand == 0:
            tk = cand
            break

    Mp = _round_up(M, 128)
    Np = _round_up(Nn, 128)
    # 256x256 output tiles fill the v6e/v7x 2x256^2 MXU; fall back to 128 so
    # small layers keep >=2 blocks on a parallel axis (megacore / 2-TC v7x).
    tm = 256 if (Mp % 256 == 0 and Mp // 256 >= 2) else 128
    tn = 256 if (Np % 256 == 0 and Np // 256 >= 2 and Mp // tm >= 2) else 128

    a_p = jnp.pad(a.astype(jnp.bfloat16), ((0, Mp - M), (0, Kp - K)))
    b_p = jnp.pad(b.astype(jnp.bfloat16), ((0, Kp - K), (0, Np - Nn)))
    bias_p = jnp.pad(bias.astype(jnp.float32), (0, Np - Nn)).reshape(1, Np)

    gm, gn, gk = Mp // tm, Np // tn, Kp // tk

    out_shapes = [jax.ShapeDtypeStruct((Mp, Np), out_dtype)]
    out_specs = [pl.BlockSpec((tm, tn), lambda i, j, k: (i, j))]
    if with_stats:
        out_shapes.append(jax.ShapeDtypeStruct((gm, 8, Np), jnp.float32))
        out_shapes.append(jax.ShapeDtypeStruct((gm, 8, Np), jnp.float32))
        out_specs.append(pl.BlockSpec((1, 8, tn), lambda i, j, k: (i, 0, j)))
        out_specs.append(pl.BlockSpec((1, 8, tn), lambda i, j, k: (i, 0, j)))

    res = pl.pallas_call(
        functools.partial(_matmul_bias_kernel, relu=relu,
                          with_stats=with_stats),
        out_shape=tuple(out_shapes),
        grid_spec=pltpu.PrefetchScalarGridSpec(
            num_scalar_prefetch=0,
            grid=(gm, gn, gk),
            in_specs=[
                pl.BlockSpec((tm, tk), lambda i, j, k: (i, k)),
                pl.BlockSpec((tk, tn), lambda i, j, k: (k, j)),
                pl.BlockSpec((1, tn), lambda i, j, k: (0, j)),
            ],
            out_specs=out_specs,
            scratch_shapes=[pltpu.VMEM((tm, tn), jnp.float32)],
        ),
        compiler_params=pltpu.CompilerParams(
            dimension_semantics=("parallel", "parallel", "arbitrary")),
    )(a_p, b_p, bias_p)

    if with_stats:
        y, s1, s2 = res
        # Padded rows of A are zero => they contribute 0 to the accumulator
        # sums, so summing over all row tiles gives exact sums over M rows.
        sum_c = s1[:, 0, :Nn].sum(axis=0)
        sq_c = s2[:, 0, :Nn].sum(axis=0)
        return y[:M, :Nn], sum_c, sq_c
    return res[0][:M, :Nn]


def bn_leakyrelu(x2d, scale, shift):
    """x2d: (M, C) bf16; per-channel f32 scale/shift; fused LeakyReLU(0.2)."""
    M, C = x2d.shape
    # Larger row tiles amortize per-grid-step overhead on this HBM-bound op.
    tm = min(512, _round_up(M, 128))
    Mp = _round_up(M, tm)
    x_p = jnp.pad(x2d, ((0, Mp - M), (0, 0)))
    scale2 = scale.astype(jnp.float32).reshape(1, C)
    shift2 = shift.astype(jnp.float32).reshape(1, C)

    out = pl.pallas_call(
        _bn_lrelu_kernel,
        out_shape=jax.ShapeDtypeStruct((Mp, C), x2d.dtype),
        grid_spec=pltpu.PrefetchScalarGridSpec(
            num_scalar_prefetch=0,
            grid=(Mp // tm,),
            in_specs=[
                pl.BlockSpec((tm, C), lambda i: (i, 0)),
                pl.BlockSpec((1, C), lambda i: (0, 0)),
                pl.BlockSpec((1, C), lambda i: (0, 0)),
            ],
            out_specs=pl.BlockSpec((tm, C), lambda i: (i, 0)),
        ),
        compiler_params=pltpu.CompilerParams(
            dimension_semantics=("parallel",)),
    )(x_p, scale2, shift2)
    return out[:M]


def conv3d(x, w, b, *, stride=1, relu=False, with_stats=False,
           out_dtype=jnp.bfloat16):
    """Conv3d k=3, pad=1. x: (N,D,H,W,Cin), w: (3,3,3,Cin,Cout), b: (Cout,)."""
    N, D, H, W, Cin = x.shape
    Cout = w.shape[-1]
    Do = (D + 2 - 3) // stride + 1
    Ho = (H + 2 - 3) // stride + 1
    Wo = (W + 2 - 3) // stride + 1

    # TODO(synk): fuse the 27-tap gather into the matmul reduction axis
    # (pl.ANY input + per-tap DMA with element offsets) to avoid materializing
    # the im2col matrix in HBM; kept as a bf16 im2col here for robustness.
    xp = jnp.pad(x.astype(jnp.bfloat16),
                 ((0, 0), (1, 1), (1, 1), (1, 1), (0, 0)))
    patches = []
    for kd in range(3):
        for kh in range(3):
            for kw in range(3):
                sl = xp[:,
                        kd:kd + (Do - 1) * stride + 1:stride,
                        kh:kh + (Ho - 1) * stride + 1:stride,
                        kw:kw + (Wo - 1) * stride + 1:stride, :]
                patches.append(sl)
    # (N, Do, Ho, Wo, 27, Cin) -> (M, 27*Cin); order matches w.reshape below.
    a = jnp.stack(patches, axis=-2).reshape(N * Do * Ho * Wo, 27 * Cin)
    bmat = w.astype(jnp.bfloat16).reshape(27 * Cin, Cout)

    res = matmul_bias(a, bmat, b, relu=relu, with_stats=with_stats,
                      out_dtype=out_dtype)
    if with_stats:
        y2d, sum_c, sq_c = res
        return y2d.reshape(N, Do, Ho, Wo, Cout), sum_c, sq_c
    return res.reshape(N, Do, Ho, Wo, Cout)


def down_block(x, w, b, gamma, beta, *, stride):
    """Conv3d -> BatchNorm3d (batch statistics, eps=1e-5) -> LeakyReLU(0.2)."""
    y, sum_c, sq_c = conv3d(x, w, b, stride=stride, relu=False,
                            with_stats=True, out_dtype=jnp.bfloat16)
    N, Do, Ho, Wo, Cout = y.shape
    cnt = float(N * Do * Ho * Wo)
    # Stats were computed on the pre-bias accumulator: bias only shifts mean.
    mean_acc = sum_c / cnt
    var = jnp.maximum(sq_c / cnt - mean_acc * mean_acc, 0.0)  # biased, like BN
    mean = mean_acc + b.astype(jnp.float32)
    scale = gamma / jnp.sqrt(var + 1e-5)
    shift = beta - mean * scale
    out = bn_leakyrelu(y.reshape(-1, Cout), scale, shift)
    return out.reshape(y.shape)


# ---------------------------------------------------------------------------
# Parameter init (deterministic, synthetic)
# ---------------------------------------------------------------------------
def init_params(key, embedding_dim, latent_dim):
    def conv_p(k, cin, cout):
        kw, kb = jax.random.split(k)
        std = (2.0 / (27 * cin)) ** 0.5
        w = std * jax.random.normal(kw, (3, 3, 3, cin, cout), jnp.float32)
        b = 0.01 * jax.random.normal(kb, (cout,), jnp.float32)
        return w, b

    def bn_p(k, c):
        kg, kb = jax.random.split(k)
        gamma = 1.0 + 0.1 * jax.random.normal(kg, (c,), jnp.float32)
        beta = 0.1 * jax.random.normal(kb, (c,), jnp.float32)
        return gamma, beta

    keys = jax.random.split(key, 8)
    return {
        "initial": conv_p(keys[0], embedding_dim, 64),
        "down1_conv": conv_p(keys[1], 64, 128),
        "down1_bn": bn_p(keys[2], 128),
        "down2_conv": conv_p(keys[3], 128, 256),
        "down2_bn": bn_p(keys[4], 256),
        "down3_conv": conv_p(keys[5], 256, 512),
        "down3_bn": bn_p(keys[6], 512),
        "final": conv_p(keys[7], 512, latent_dim),
    }


# ---------------------------------------------------------------------------
# Full Encoder forward
# ---------------------------------------------------------------------------
def encoder_forward(x_ncdhw, params):
    # NCDHW (PyTorch) -> NDHWC; inter-layer activations kept in bf16.
    x = jnp.transpose(x_ncdhw, (0, 2, 3, 4, 1)).astype(jnp.bfloat16)

    w, b = params["initial"]
    x = conv3d(x, w, b, stride=1, relu=True)             # F.relu(initial(x))

    w, b = params["down1_conv"]
    g, be = params["down1_bn"]
    x = down_block(x, w, b, g, be, stride=1)             # down1

    w, b = params["down2_conv"]
    g, be = params["down2_bn"]
    x = down_block(x, w, b, g, be, stride=2)             # down2

    w, b = params["down3_conv"]
    g, be = params["down3_bn"]
    x = down_block(x, w, b, g, be, stride=1)             # down3

    w, b = params["final"]
    x = conv3d(x, w, b, stride=1, relu=False,
               out_dtype=jnp.float32)                    # final_layer (fp32)

    # back to NCDHW
    return jnp.transpose(x, (0, 4, 1, 2, 3))


if __name__ == "__main__":
    key = jax.random.PRNGKey(0)
    k_x, k_p = jax.random.split(key)

    embedding_dim, latent_dim = 4, 8
    N, D, H, W = 2, 8, 8, 8
    x = jax.random.normal(k_x, (N, embedding_dim, D, H, W), jnp.float32)

    params = init_params(k_p, embedding_dim, latent_dim)

    y = encoder_forward(x, params)
    jax.block_until_ready(y)

    # down2 has stride 2 -> spatial 8 -> 4
    assert y.shape == (N, latent_dim, 4, 4, 4), y.shape
    assert y.dtype == jnp.float32
    assert jnp.all(jnp.isfinite(y))
    print("KERNEL_OK")
</pallas_src>

<mosaic_0001>
module attributes {stable_mosaic.version = 11 : i64} {
  func.func @_matmul_bias_kernel(%arg0: i32, %arg1: i32, %arg2: i32, %arg3: memref<256x128xbf16, #tpu.memory_space<vmem>>, %arg4: memref<128x128xbf16, #tpu.memory_space<vmem>>, %arg5: memref<1x128xf32, #tpu.memory_space<vmem>>, %arg6: memref<256x128xbf16, #tpu.memory_space<vmem>>, %arg7: memref<256x128xf32, #tpu.memory_space<vmem>>) attributes {dimension_semantics = [#tpu.dimension_semantics<parallel>, #tpu.dimension_semantics<parallel>, #tpu.dimension_semantics<arbitrary>], iteration_bounds = array<i64: 4, 1, 1>, scalar_prefetch = 0 : i64, scratch_operands = 1 : i64, tpu.core_type = #tpu.core_type<tc>, window_params = [{transform_indices = @transform_0, window_bounds = array<i64: 256, 128>}, {transform_indices = @transform_1, window_bounds = array<i64: 128, 128>}, {transform_indices = @transform_2, window_bounds = array<i64: 1, 128>}, {transform_indices = @transform_3, window_bounds = array<i64: 256, 128>}]} {
    %c0_i32 = arith.constant 0 : i32
    %0 = arith.cmpi eq, %arg2, %c0_i32 : i32
    %1 = arith.extui %0 : i1 to i32
    %c0_i32_0 = arith.constant 0 : i32
    %2 = arith.cmpi ne, %1, %c0_i32_0 : i32
    scf.if %2 {
      %cst_10 = arith.constant 0.000000e+00 : f32
      %12 = vector.broadcast %cst_10 : f32 to vector<256x128xf32>
      %c0_11 = arith.constant 0 : index
      %c0_12 = arith.constant 0 : index
      %13 = vector.load %arg7[%c0_11, %c0_12] : memref<256x128xf32, #tpu.memory_space<vmem>>, vector<256x128xf32>
      tpu.vector_store %arg7[%c0_11, %c0_12], %12 {strides = array<i32>} : memref<256x128xf32, #tpu.memory_space<vmem>>, vector<256x128xf32>,
    } else {
    }
    %c0 = arith.constant 0 : index
    %c0_1 = arith.constant 0 : index
    %3 = vector.load %arg7[%c0, %c0_1] : memref<256x128xf32, #tpu.memory_space<vmem>>, vector<256x128xf32>
    %c0_2 = arith.constant 0 : index
    %c0_3 = arith.constant 0 : index
    %4 = vector.load %arg3[%c0_2, %c0_3] : memref<256x128xbf16, #tpu.memory_space<vmem>>, vector<256x128xbf16>
    %c0_4 = arith.constant 0 : index
    %c0_5 = arith.constant 0 : index
    %5 = vector.load %arg4[%c0_4, %c0_5] : memref<128x128xbf16, #tpu.memory_space<vmem>>, vector<128x128xbf16>
    %cst = arith.constant dense<0.000000e+00> : vector<256x128xf32>
    %6 = tpu.matmul %4, %5, %cst {dimension_numbers = #tpu.dot_dimension_numbers<[1], [0], [0], [1], [0, 0, 1, 1], [], []>} : vector<256x128xbf16>, vector<128x128xbf16>, vector<256x128xf32> -> vector<256x128xf32>
    %7 = arith.addf %3, %6 : vector<256x128xf32>
    %c0_6 = arith.constant 0 : index
    %c0_7 = arith.constant 0 : index
    %8 = vector.load %arg7[%c0_6, %c0_7] : memref<256x128xf32, #tpu.memory_space<vmem>>, vector<256x128xf32>
    tpu.vector_store %arg7[%c0_6, %c0_7], %7 {strides = array<i32>} : memref<256x128xf32, #tpu.memory_space<vmem>>, vector<256x128xf32>,
    %c0_i32_8 = arith.constant 0 : i32
    %9 = arith.cmpi eq, %arg2, %c0_i32_8 : i32
    %10 = arith.extui %9 : i1 to i32
    %c0_i32_9 = arith.constant 0 : i32
    %11 = arith.cmpi ne, %10, %c0_i32_9 : i32
    scf.if %11 {
      %c0_10 = arith.constant 0 : index
      %c0_11 = arith.constant 0 : index
      %12 = vector.load %arg7[%c0_10, %c0_11] : memref<256x128xf32, #tpu.memory_space<vmem>>, vector<256x128xf32>
      %c0_12 = arith.constant 0 : index
      %c0_13 = arith.constant 0 : index
      %13 = vector.load %arg5[%c0_12, %c0_13] : memref<1x128xf32, #tpu.memory_space<vmem>>, vector<1x128xf32>
      %14 = vector.broadcast %13 : vector<1x128xf32> to vector<256x128xf32>
      %15 = arith.addf %12, %14 : vector<256x128xf32>
      %cst_14 = arith.constant 0.000000e+00 : f32
      %16 = vector.broadcast %cst_14 : f32 to vector<256x128xf32>
      %17 = arith.maximumf %15, %16 : vector<256x128xf32>
      %18 = arith.truncf %17 : vector<256x128xf32> to vector<256x128xbf16>
      %c0_15 = arith.constant 0 : index
      %c0_16 = arith.constant 0 : index
      %19 = vector.load %arg6[%c0_15, %c0_16] : memref<256x128xbf16, #tpu.memory_space<vmem>>, vector<256x128xbf16>
      tpu.vector_store %arg6[%c0_15, %c0_16], %18 {strides = array<i32>} : memref<256x128xbf16, #tpu.memory_space<vmem>>, vector<256x128xbf16>,
    } else {
    }
    return
  }
  func.func @transform_0(%arg0: i32, %arg1: i32, %arg2: i32) -> (i32, i32) {
    %c0_i32 = arith.constant 0 : i32
    return %arg0, %arg2 : i32, i32
  }
  func.func @transform_1(%arg0: i32, %arg1: i32, %arg2: i32) -> (i32, i32) {
    %c0_i32 = arith.constant 0 : i32
    return %arg2, %arg1 : i32, i32
  }
  func.func @transform_2(%arg0: i32, %arg1: i32, %arg2: i32) -> (i32, i32) {
    %c0_i32 = arith.constant 0 : i32
    %c0_i32_0 = arith.constant 0 : i32
    return %c0_i32, %arg1 : i32, i32
  }
  func.func @transform_3(%arg0: i32, %arg1: i32, %arg2: i32) -> (i32, i32) {
    %c0_i32 = arith.constant 0 : i32
    return %arg0, %arg1 : i32, i32
  }
}

</mosaic_0001>

<llo_original>
// kernel: tpu_custom_call.1
$region0: #{tpu_custom_call.1}
  #allocation0 [shape = 'u32[]', space=smem, size = 0x4, offset = 0x4, fixed_abs, tag = 'smem constant byte address 0x4 - core index']
  #allocation1 [shape = 'u32[72,128]{1,0:T(1,128)}', space=vmem, size = 0x9000, scoped, tag = 'internal scratch']
  #allocation2 [shape = 'f32[256,128]{1,0:T(8,128)}', space=vmem, size = 0x20000, scoped, tag = 'scratch operand']
  %s0 = inlined_call_operand.hbm [shape: bf16[1024,128], index: 0, kind: input, shape index: {}]
  %s1 = inlined_call_operand.hbm [shape: bf16[128,128], index: 1, kind: input, shape index: {}]
  %s2 = inlined_call_operand.vmem [shape: f32[1,128], index: 2, kind: input, shape index: {}]
  %s3 = inlined_call_operand.hbm [shape: bf16[1024,128], index: 3, kind: output, shape index: {}]
  %s4 = sld [smem:[#allocation0]]
  $region61: #{tpu_custom_call.1} parent=0
    _
  %s6 = ssub.s32 1, %s4
  %s7 = scalar_select 0, %s6, %s4
  $region1: #{tpu_custom_call.1} parent=0
    #allocation3 [shape = 'u8[131072]{0}', space=vmem, size = 0x20000, scoped, tag = 'input window, operand 0']
    #allocation4 [shape = 's32[2]{0}', space=sflag, size = 0x8, scoped, tag = 'scoped memory for tpu_custom_call.1']
    #allocation5 [shape = 's32[2]{0}', space=sflag, size = 0x8, scoped, tag = 'scoped memory for tpu_custom_call.1']
    #allocation6 [shape = 'u8[32768]{0}', space=vmem, size = 0x8000, scoped, tag = 'input window, operand 1, single buffered']
    #allocation7 [shape = 's32[1]{0}', space=sflag, size = 0x4, scoped, tag = 'scoped memory for tpu_custom_call.1']
    #allocation8 [shape = 'u8[131072]{0}', space=vmem, size = 0x20000, scoped, tag = 'output window, operand 0']
    %8 = vsyncpa [#allocation4], 0
    %s9 = scalar_lea.sflag [#allocation4], 1
    %10 = vsyncpa %s9, 0
    %11 = vsyncpa [#allocation7], 0
    %12 = vsyncpa [#allocation5], 0
    %s13 = scalar_lea.sflag [#allocation5], 1
    %14 = vsyncpa %s13, 0
    loop: start=0, step=1, limit=6
    $region2: #{tpu_custom_call.1} parent=1 // loop_pre_header
      _
    $region3: #{tpu_custom_call.1} parent=1 // loop_header
      %s16 = sphi 0, %s20
      %p17 = scmp.ge.s32.totalorder %s16, 6
      %s23 = sphi 0, %s42
      %s24 = sphi 0, %s38
      %s25 = sphi 0, %s34
      %s26 = sphi 0, %s23
      %s27 = sphi 0, %s24
      %s28 = sphi 0, %s25
      %s29 = sphi 0, %s26
      %s30 = sphi 0, %s27
      %s31 = sphi 0, %s28
      %s47 = sphi 0, %s49
      %s50 = sphi 0, %s47
      %s51 = sphi 0, %s50
      %s67 = sphi 0, %s51
      %s75 = sphi 0, %s77
      %s78 = sphi 0, %s75
      %s79 = sphi 0, %s78
      %s95 = sphi 0, %s79
      %s101 = sphi 0, %s103
      %s104 = sphi 0, %s101
      %s105 = sphi 0, %s104
      %s121 = sphi 0, %s105
      %s129 = sphi 0, %s131
      %s132 = sphi 0, %s129
      %s133 = sphi 0, %s132
      %s149 = sphi 0, %s133
    $region4: #{tpu_custom_call.1} parent=1 // loop_header_branch
      %19 = sbr.rel (%p17) target = $region8
    $region5: #{tpu_custom_call.1} parent=1 // loop_body
      %s21 = ssub.s32 %s16, 1
      %s22 = ssub.s32 %s16, 2
      %s32 = sadd.s32 1, %s25
      %p33 = scmp.ge.s32.totalorder %s32, 1
      %s34 = scalar_select %p33, 0, %s32
      %s35 = sadd.s32 1, %s24
      %s36 = scalar_select %p33, %s35, %s24
      %p37 = scmp.ge.s32.totalorder %s36, 1
      %s38 = scalar_select %p37, 0, %s36
      %s39 = sadd.s32 1, %s23
      %s40 = scalar_select %p37, %s39, %s23
      %p41 = scmp.ge.s32.totalorder %s40, 4
      %s42 = scalar_select %p41, 0, %s40
      %s43 = ssub.s32 %s23, %s42
      %s44 = ssub.s32 %s25, %s34
      %s45 = sor.u32 %s43, %s44
      %p46 = scmp.eq.s32.totalorder %s45, 0
      %s48 = sadd.s32 %s47, 1
      %s49 = scalar_select %p46, %s47, %s48
      %p52 = pneg %p46
      %p53 = scmp.eq.s32.totalorder %s16, 3
      %p54 = por %p52, %p53
      %p55 = scmp.ne.s32.totalorder %s47, %s50
      %p56 = scmp.eq.s32.totalorder %s16, 0
      %p57 = por %p55, %p56
      %p58 = scmp.ne.s32.totalorder %s47, %s50
      %p59 = scmp.eq.s32.totalorder %s21, 3
      %p60 = por %p58, %p59
      %p61 = scmp.ne.s32.totalorder %s50, %s51
      %p62 = scmp.eq.s32.totalorder %s21, 0
      %p63 = por %p61, %p62
      %p64 = scmp.ne.s32.totalorder %s50, %s51
      %p65 = scmp.eq.s32.totalorder %s22, 3
      %p66 = por %p64, %p65
      %p68 = scmp.ne.s32.totalorder %s51, %s67
      %p69 = scmp.eq.s32.totalorder %s22, 0
      %p70 = por %p68, %p69
      %s71 = ssub.s32 %s25, %s34
      %s72 = ssub.s32 %s24, %s38
      %s73 = sor.u32 %s71, %s72
      %p74 = scmp.eq.s32.totalorder %s73, 0
      %s76 = sadd.s32 %s75, 1
      %s77 = scalar_select %p74, %s75, %s76
      %p80 = pneg %p74
      %p81 = scmp.eq.s32.totalorder %s16, 3
      %p82 = por %p80, %p81
      %p83 = scmp.ne.s32.totalorder %s75, %s78
      %p84 = scmp.eq.s32.totalorder %s16, 0
      %p85 = por %p83, %p84
      %p86 = scmp.ne.s32.totalorder %s75, %s78
      %p87 = scmp.eq.s32.totalorder %s21, 3
      %p88 = por %p86, %p87
      %p89 = scmp.ne.s32.totalorder %s78, %s79
      %p90 = scmp.eq.s32.totalorder %s21, 0
      %p91 = por %p89, %p90
      %p92 = scmp.ne.s32.totalorder %s78, %s79
      %p93 = scmp.eq.s32.totalorder %s22, 3
      %p94 = por %p92, %p93
      %p96 = scmp.ne.s32.totalorder %s79, %s95
      %p97 = scmp.eq.s32.totalorder %s22, 0
      %p98 = por %p96, %p97
      %s99 = ssub.s32 %s24, %s38
      %p100 = scmp.eq.s32.totalorder %s99, 0
      %s102 = sadd.s32 %s101, 1
      %s103 = scalar_select %p100, %s101, %s102
      %p106 = pneg %p100
      %p107 = scmp.eq.s32.totalorder %s16, 3
      %p108 = por %p106, %p107
      %p109 = scmp.ne.s32.totalorder %s101, %s104
      %p110 = scmp.eq.s32.totalorder %s16, 0
      %p111 = por %p109, %p110
      %p112 = scmp.ne.s32.totalorder %s101, %s104
      %p113 = scmp.eq.s32.totalorder %s21, 3
      %p114 = por %p112, %p113
      %p115 = scmp.ne.s32.totalorder %s104, %s105
      %p116 = scmp.eq.s32.totalorder %s21, 0
      %p117 = por %p115, %p116
      %p118 = scmp.ne.s32.totalorder %s104, %s105
      %p119 = scmp.eq.s32.totalorder %s22, 3
      %p120 = por %p118, %p119
      %p122 = scmp.ne.s32.totalorder %s105, %s121
      %p123 = scmp.eq.s32.totalorder %s22, 0
      %p124 = por %p122, %p123
      %s125 = ssub.s32 %s23, %s42
      %s126 = ssub.s32 %s24, %s38
      %s127 = sor.u32 %s125, %s126
      %p128 = scmp.eq.s32.totalorder %s127, 0
      %s130 = sadd.s32 %s129, 1
      %s131 = scalar_select %p128, %s129, %s130
      %p134 = pneg %p128
      %p135 = scmp.eq.s32.totalorder %s16, 3
      %p136 = por %p134, %p135
      %p137 = scmp.ne.s32.totalorder %s129, %s132
      %p138 = scmp.eq.s32.totalorder %s16, 0
      %p139 = por %p137, %p138
      %p140 = scmp.ne.s32.totalorder %s129, %s132
      %p141 = scmp.eq.s32.totalorder %s21, 3
      %p142 = por %p140, %p141
      %p143 = scmp.ne.s32.totalorder %s132, %s133
      %p144 = scmp.eq.s32.totalorder %s21, 0
      %p145 = por %p143, %p144
      %p146 = scmp.ne.s32.totalorder %s132, %s133
      %p147 = scmp.eq.s32.totalorder %s22, 3
      %p148 = por %p146, %p147
      %p150 = scmp.ne.s32.totalorder %s133, %s149
      %p151 = scmp.eq.s32.totalorder %s22, 0
      %p152 = por %p150, %p151
      %p153 = scmp.le.s32.totalorder 1, %s16
      %p154 = scmp.lt.s32.totalorder %s16, 5
      %p155 = pnand %p153, %p154
      %p156 = pneg %p155
      // Predicated region
      $region9: #{tpu_custom_call.1} parent=5 // pred_check
        _
      $region10: #{tpu_custom_call.1} parent=5 // pred_check_branch
        %158 = sbr.rel (%p155) target = $region12
      $region11: #{tpu_custom_call.1} parent=5 // pred_region
        %s159 = ssub.s32 %s16, 1
        // Predicated region
        $region13: #{tpu_custom_call.1} parent=11 // pred_check
          %p160 = pneg %p91
        $region14: #{tpu_custom_call.1} parent=11 // pred_check_branch
          %162 = sbr.rel (%p160) target = $region16
        $region15: #{tpu_custom_call.1} parent=11 // pred_region
          %s163 = smul.u32 16, %s28
          %165 = vsyncadd [#allocation7], 0
          %s166 = sadd.s32 %s27, %s163
          %s167 = smul.addr %s166, 4
          %s168 = scalar_lea.hbm %s1, %s167
          %s169 = sshll.u32 %s168, 4
          %s170 = int_to_ptr.hbm [resolvable:$true] %s169
          %s171 = sshll.u32 [#allocation6], 4
          %s172 = int_to_ptr.vmem [resolvable:$true] %s171
          %177 = dma.hbm_to_vmem [thread:$0]  %s170, 1024, %s172, [#allocation7], 64, 64, 4
        $region16: #{tpu_custom_call.1} parent=11 // pred_fallthru
          _
        // Predicated region
        $region17: #{tpu_custom_call.1} parent=11 // pred_check
          %p178 = pneg %p117
        $region18: #{tpu_custom_call.1} parent=11 // pred_check_branch
          %180 = sbr.rel (%p178) target = $region20
        $region19: #{tpu_custom_call.1} parent=11 // pred_region
          %p181 = scmp.lt.s32.totalorder %s27, 0
          %s182 = scalar_select %p181, %s27, 0
          %s183 = scalar_lea.vmem %s2, %s182
        $region20: #{tpu_custom_call.1} parent=11 // pred_fallthru
          _
      $region12: #{tpu_custom_call.1} parent=5 // pred_fallthru
        _
      %p184 = scmp.lt.s32.totalorder %s16, 4
      // Predicated region
      $region21: #{tpu_custom_call.1} parent=5 // pred_check
        %p185 = pneg %p184
      $region22: #{tpu_custom_call.1} parent=5 // pred_check_branch
        %187 = sbr.rel (%p185) target = $region24
      $region23: #{tpu_custom_call.1} parent=5 // pred_region
        // Predicated region
        $region25: #{tpu_custom_call.1} parent=23 // pred_check
          %p188 = pneg %p57
        $region26: #{tpu_custom_call.1} parent=23 // pred_check_branch
          %190 = sbr.rel (%p188) target = $region28
        $region27: #{tpu_custom_call.1} parent=23 // pred_region
          %s191 = sand.u32 %s47, 1
          %s192 = scalar_lea.sflag [#allocation4], %s191
          %s193 = sand.u32 %s47, 1
          %s194 = smul.addr %s193, 128
          %s195 = scalar_lea.vmem [#allocation3], %s194
          %s196 = smul.u32 32, %s23
          %198 = vsyncadd %s192, 0
          %s199 = sadd.s32 %s25, %s196
          %s200 = smul.addr %s199, 4
          %s201 = scalar_lea.hbm %s0, %s200
          %s202 = sshll.u32 %s201, 4
          %s203 = int_to_ptr.hbm [resolvable:$true] %s202
          %s204 = sshll.u32 %s195, 4
          %s205 = int_to_ptr.vmem [resolvable:$true] %s204
          %210 = dma.hbm_to_vmem [thread:$0]  %s203, 2048, %s205, %s192, 64, 64, 4
        $region28: #{tpu_custom_call.1} parent=23 // pred_fallthru
          _
      $region24: #{tpu_custom_call.1} parent=5 // pred_fallthru
        _
      %p211 = scmp.le.s32.totalorder 1, %s16
      %p212 = scmp.lt.s32.totalorder %s16, 5
      %p213 = pnand %p211, %p212
      %p214 = pneg %p213
      // Predicated region
      $region29: #{tpu_custom_call.1} parent=5 // pred_check
        _
      $region30: #{tpu_custom_call.1} parent=5 // pred_check_branch
        %216 = sbr.rel (%p213) target = $region32
      $region31: #{tpu_custom_call.1} parent=5 // pred_region
        %s217 = ssub.s32 %s16, 1
        %s218 = sand.u32 %s50, 1
        %s219 = scalar_lea.sflag [#allocation4], %s218
        %s220 = sand.u32 %s50, 1
        %s221 = smul.addr %s220, 128
        %s222 = scalar_lea.vmem [#allocation3], %s221
        // Predicated region
        $region33: #{tpu_custom_call.1} parent=31 // pred_check
          %p223 = pneg %p63
        $region34: #{tpu_custom_call.1} parent=31 // pred_check_branch
          %225 = sbr.rel (%p223) target = $region36
        $region35: #{tpu_custom_call.1} parent=31 // pred_region
          %227 = dma.done %s219, 2048
        $region36: #{tpu_custom_call.1} parent=31 // pred_fallthru
          _
        // Predicated region
        $region37: #{tpu_custom_call.1} parent=31 // pred_check
          %p228 = pneg %p91
        $region38: #{tpu_custom_call.1} parent=31 // pred_check_branch
          %230 = sbr.rel (%p228) target = $region40
        $region39: #{tpu_custom_call.1} parent=31 // pred_region
          %232 = dma.done [#allocation7], 1024
        $region40: #{tpu_custom_call.1} parent=31 // pred_fallthru
          _
        %s233 = sand.u32 %s50, 1
        %s234 = scalar_lea.sflag [#allocation4], %s233
        %s235 = sand.u32 %s50, 1
        %s236 = smul.addr %s235, 128
        %s237 = scalar_lea.vmem [#allocation3], %s236
        %p238 = pneg %p63
        %p239 = pneg %p60
        %p240 = pneg %p91
        %p241 = pneg %p88
        %p242 = scmp.lt.s32.totalorder %s27, 0
        %s243 = scalar_select %p242, %s27, 0
        %s244 = scalar_lea.vmem %s2, %s243
        %p245 = pneg %p117
        %p246 = pneg %p114
        %p247 = pneg %p145
        %p248 = pneg %p142
        %s249 = sand.u32 %s132, 1
        %s250 = scalar_lea.sflag [#allocation5], %s249
        %s251 = sand.u32 %s132, 1
        %s252 = smul.addr %s251, 128
        %s253 = scalar_lea.vmem [#allocation8], %s252
        %s254 = smul.u32 32, %s26
        %s255 = smul.u32 16, %s28
        %p256 = scmp.lt.s32.totalorder %s27, 0
        %s257 = scalar_select %p256, %s27, 0
        %s258 = scalar_lea.vmem %s2, %s257
        %s259 = smul.u32 32, %s26
        %p260 = scmp.eq.s32.totalorder %s28, 0
        // Predicated region
        $region41: #{tpu_custom_call.1} parent=31 // pred_check
          %p261 = pneg %p260
        $region42: #{tpu_custom_call.1} parent=31 // pred_check_branch
          %263 = sbr.rel (%p261) target = $region44
        $region43: #{tpu_custom_call.1} parent=31 // pred_region
          %264 = vst [vmem:[#allocation2] sm:$0xff] 0.0
          %265 = vst [vmem:[#allocation2 + $0x8] sm:$0xff] 0.0
          %266 = vst [vmem:[#allocation2 + $0x10] sm:$0xff] 0.0
          %267 = vst [vmem:[#allocation2 + $0x18] sm:$0xff] 0.0
          %268 = vst [vmem:[#allocation2 + $0x20] sm:$0xff] 0.0
          %269 = vst [vmem:[#allocation2 + $0x28] sm:$0xff] 0.0
          %270 = vst [vmem:[#allocation2 + $0x30] sm:$0xff] 0.0
          %271 = vst [vmem:[#allocation2 + $0x38] sm:$0xff] 0.0
          %272 = vst [vmem:[#allocation2 + $0x40] sm:$0xff] 0.0
          %273 = vst [vmem:[#allocation2 + $0x48] sm:$0xff] 0.0
          %274 = vst [vmem:[#allocation2 + $0x50] sm:$0xff] 0.0
          %275 = vst [vmem:[#allocation2 + $0x58] sm:$0xff] 0.0
          %276 = vst [vmem:[#allocation2 + $0x60] sm:$0xff] 0.0
          %277 = vst [vmem:[#allocation2 + $0x68] sm:$0xff] 0.0
          %278 = vst [vmem:[#allocation2 + $0x70] sm:$0xff] 0.0
          %279 = vst [vmem:[#allocation2 + $0x78] sm:$0xff] 0.0
          %280 = vst [vmem:[#allocation2 + $0x80] sm:$0xff] 0.0
          %281 = vst [vmem:[#allocation2 + $0x88] sm:$0xff] 0.0
          %282 = vst [vmem:[#allocation2 + $0x90] sm:$0xff] 0.0
          %283 = vst [vmem:[#allocation2 + $0x98] sm:$0xff] 0.0
          %284 = vst [vmem:[#allocation2 + $0xa0] sm:$0xff] 0.0
          %285 = vst [vmem:[#allocation2 + $0xa8] sm:$0xff] 0.0
          %286 = vst [vmem:[#allocation2 + $0xb0] sm:$0xff] 0.0
          %287 = vst [vmem:[#allocation2 + $0xb8] sm:$0xff] 0.0
          %288 = vst [vmem:[#allocation2 + $0xc0] sm:$0xff] 0.0
          %289 = vst [vmem:[#allocation2 + $0xc8] sm:$0xff] 0.0
          %290 = vst [vmem:[#allocation2 + $0xd0] sm:$0xff] 0.0
          %291 = vst [vmem:[#allocation2 + $0xd8] sm:$0xff] 0.0
          %292 = vst [vmem:[#allocation2 + $0xe0] sm:$0xff] 0.0
          %293 = vst [vmem:[#allocation2 + $0xe8] sm:$0xff] 0.0
          %294 = vst [vmem:[#allocation2 + $0xf0] sm:$0xff] 0.0
          %295 = vst [vmem:[#allocation2 + $0xf8] sm:$0xff] 0.0
        $region44: #{tpu_custom_call.1} parent=31 // pred_fallthru
          _
        %v296 = vld [vmem:[#allocation2] sm:$0xff]
        %v297 = vld [vmem:[#allocation2 + $0x8] sm:$0xff]
        %v298 = vld [vmem:[#allocation2 + $0x10] sm:$0xff]
        %v299 = vld [vmem:[#allocation2 + $0x18] sm:$0xff]
        %v300 = vld [vmem:[#allocation2 + $0x20] sm:$0xff]
        %v301 = vld [vmem:[#allocation2 + $0x28] sm:$0xff]
        %v302 = vld [vmem:[#allocation2 + $0x30] sm:$0xff]
        %v303 = vld [vmem:[#allocation2 + $0x38] sm:$0xff]
        %v304 = vld [vmem:[#allocation2 + $0x40] sm:$0xff]
        %v305 = vld [vmem:[#allocation2 + $0x48] sm:$0xff]
        %v306 = vld [vmem:[#allocation2 + $0x50] sm:$0xff]
        %v307 = vld [vmem:[#allocation2 + $0x58] sm:$0xff]
        %v308 = vld [vmem:[#allocation2 + $0x60] sm:$0xff]
        %v309 = vld [vmem:[#allocation2 + $0x68] sm:$0xff]
        %v310 = vld [vmem:[#allocation2 + $0x70] sm:$0xff]
        %v311 = vld [vmem:[#allocation2 + $0x78] sm:$0xff]
        %v312 = vld [vmem:[#allocation2 + $0x80] sm:$0xff]
        %v313 = vld [vmem:[#allocation2 + $0x88] sm:$0xff]
        %v314 = vld [vmem:[#allocation2 + $0x90] sm:$0xff]
        %v315 = vld [vmem:[#allocation2 + $0x98] sm:$0xff]
        %v316 = vld [vmem:[#allocation2 + $0xa0] sm:$0xff]
        %v317 = vld [vmem:[#allocation2 + $0xa8] sm:$0xff]
        %v318 = vld [vmem:[#allocation2 + $0xb0] sm:$0xff]
        %v319 = vld [vmem:[#allocation2 + $0xb8] sm:$0xff]
        %v320 = vld [vmem:[#allocation2 + $0xc0] sm:$0xff]
        %v321 = vld [vmem:[#allocation2 + $0xc8] sm:$0xff]
        %v322 = vld [vmem:[#allocation2 + $0xd0] sm:$0xff]
        %v323 = vld [vmem:[#allocation2 + $0xd8] sm:$0xff]
        %v324 = vld [vmem:[#allocation2 + $0xe0] sm:$0xff]
        %v325 = vld [vmem:[#allocation2 + $0xe8] sm:$0xff]
        %v326 = vld [vmem:[#allocation2 + $0xf0] sm:$0xff]
        %v327 = vld [vmem:[#allocation2 + $0xf8] sm:$0xff]
        %v328 = vld [vmem:[%s222] sm:$0xf]
        %v329 = vld [vmem:[%s222 + $0x4] sm:$0xf]
        %v330 = vld [vmem:[%s222 + $0x8] sm:$0xf]
        %v331 = vld [vmem:[%s222 + $0xc] sm:$0xf]
        %v332 = vld [vmem:[%s222 + $0x10] sm:$0xf]
        %v333 = vld [vmem:[%s222 + $0x14] sm:$0xf]
        %v334 = vld [vmem:[%s222 + $0x18] sm:$0xf]
        %v335 = vld [vmem:[%s222 + $0x1c] sm:$0xf]
        %v336 = vld [vmem:[%s222 + $0x20] sm:$0xf]
        %v337 = vld [vmem:[%s222 + $0x24] sm:$0xf]
        %v338 = vld [vmem:[%s222 + $0x28] sm:$0xf]
        %v339 = vld [vmem:[%s222 + $0x2c] sm:$0xf]
        %v340 = vld [vmem:[%s222 + $0x30] sm:$0xf]
        %v341 = vld [vmem:[%s222 + $0x34] sm:$0xf]
        %v342 = vld [vmem:[%s222 + $0x38] sm:$0xf]
        %v343 = vld [vmem:[%s222 + $0x3c] sm:$0xf]
        %v344 = vld [vmem:[%s222 + $0x40] sm:$0xf]
        %v345 = vld [vmem:[%s222 + $0x44] sm:$0xf]
        %v346 = vld [vmem:[%s222 + $0x48] sm:$0xf]
        %v347 = vld [vmem:[%s222 + $0x4c] sm:$0xf]
        %v348 = vld [vmem:[%s222 + $0x50] sm:$0xf]
        %v349 = vld [vmem:[%s222 + $0x54] sm:$0xf]
        %v350 = vld [vmem:[%s222 + $0x58] sm:$0xf]
        %v351 = vld [vmem:[%s222 + $0x5c] sm:$0xf]
        %v352 = vld [vmem:[%s222 + $0x60] sm:$0xf]
        %v353 = vld [vmem:[%s222 + $0x64] sm:$0xf]
        %v354 = vld [vmem:[%s222 + $0x68] sm:$0xf]
        %v355 = vld [vmem:[%s222 + $0x6c] sm:$0xf]
        %v356 = vld [vmem:[%s222 + $0x70] sm:$0xf]
        %v357 = vld [vmem:[%s222 + $0x74] sm:$0xf]
        %v358 = vld [vmem:[%s222 + $0x78] sm:$0xf]
        %v359 = vld [vmem:[%s222 + $0x7c] sm:$0xf]
        %v360 = vld [vmem:[#allocation6] sm:$0xf]
        %v361 = vld [vmem:[#allocation6 + $0x4] sm:$0xf]
        %v362 = vld [vmem:[#allocation6 + $0x8] sm:$0xf]
        %v363 = vld [vmem:[#allocation6 + $0xc] sm:$0xf]
        %v364 = vld [vmem:[#allocation6 + $0x10] sm:$0xf]
        %v365 = vld [vmem:[#allocation6 + $0x14] sm:$0xf]
        %v366 = vld [vmem:[#allocation6 + $0x18] sm:$0xf]
        %v367 = vld [vmem:[#allocation6 + $0x1c] sm:$0xf]
        %v368 = vld [vmem:[#allocation6 + $0x20] sm:$0xf]
        %v369 = vld [vmem:[#allocation6 + $0x24] sm:$0xf]
        %v370 = vld [vmem:[#allocation6 + $0x28] sm:$0xf]
        %v371 = vld [vmem:[#allocation6 + $0x2c] sm:$0xf]
        %v372 = vld [vmem:[#allocation6 + $0x30] sm:$0xf]
        %v373 = vld [vmem:[#allocation6 + $0x34] sm:$0xf]
        %v374 = vld [vmem:[#allocation6 + $0x38] sm:$0xf]
        %v375 = vld [vmem:[#allocation6 + $0x3c] sm:$0xf]
        %v408 = vunpack.c.l.b16 %v328
        %v409 = vunpack.c.l.b16 %v329
        %v410 = vunpack.c.l.b16 %v330
        %v411 = vunpack.c.l.b16 %v331
        %v412 = vunpack.c.l.b16 %v332
        %v413 = vunpack.c.l.b16 %v333
        %v414 = vunpack.c.l.b16 %v334
        %v415 = vunpack.c.l.b16 %v335
        %v416 = vunpack.c.l.b16 %v336
        %v417 = vunpack.c.l.b16 %v337
        %v418 = vunpack.c.l.b16 %v338
        %v419 = vunpack.c.l.b16 %v339
        %v420 = vunpack.c.l.b16 %v340
        %v421 = vunpack.c.l.b16 %v341
        %v422 = vunpack.c.l.b16 %v342
        %v423 = vunpack.c.l.b16 %v343
        %v424 = vunpack.c.l.b16 %v344
        %v425 = vunpack.c.l.b16 %v345
        %v426 = vunpack.c.l.b16 %v346
        %v427 = vunpack.c.l.b16 %v347
        %v428 = vunpack.c.l.b16 %v348
        %v429 = vunpack.c.l.b16 %v349
        %v430 = vunpack.c.l.b16 %v350
        %v431 = vunpack.c.l.b16 %v351
        %v432 = vunpack.c.l.b16 %v352
        %v433 = vunpack.c.l.b16 %v353
        %v434 = vunpack.c.l.b16 %v354
        %v435 = vunpack.c.l.b16 %v355
        %v436 = vunpack.c.l.b16 %v356
        %v437 = vunpack.c.l.b16 %v357
        %v438 = vunpack.c.l.b16 %v358
        %v439 = vunpack.c.l.b16 %v359
        %v440 = vpack.c.b16 %v409, %v408
        %v441 = vpack.c.b16 %v411, %v410
        %v442 = vpack.c.b16 %v413, %v412
        %v443 = vpack.c.b16 %v415, %v414
        %v444 = vpack.c.b16 %v417, %v416
        %v445 = vpack.c.b16 %v419, %v418
        %v446 = vpack.c.b16 %v421, %v420
        %v447 = vpack.c.b16 %v423, %v422
        %v448 = vpack.c.b16 %v425, %v424
        %v449 = vpack.c.b16 %v427, %v426
        %v450 = vpack.c.b16 %v429, %v428
        %v451 = vpack.c.b16 %v431, %v430
        %v452 = vpack.c.b16 %v433, %v432
        %v453 = vpack.c.b16 %v435, %v434
        %v454 = vpack.c.b16 %v437, %v436
        %v455 = vpack.c.b16 %v439, %v438
        %v488 = vunpack.c.l.b16 %v360
        %v489 = vunpack.c.l.b16 %v361
        %v490 = vunpack.c.l.b16 %v362
        %v491 = vunpack.c.l.b16 %v363
        %v492 = vunpack.c.l.b16 %v364
        %v493 = vunpack.c.l.b16 %v365
        %v494 = vunpack.c.l.b16 %v366
        %v495 = vunpack.c.l.b16 %v367
        %v496 = vunpack.c.l.b16 %v368
        %v497 = vunpack.c.l.b16 %v369
        %v498 = vunpack.c.l.b16 %v370
        %v499 = vunpack.c.l.b16 %v371
        %v500 = vunpack.c.l.b16 %v372
        %v501 = vunpack.c.l.b16 %v373
        %v502 = vunpack.c.l.b16 %v374
        %v503 = vunpack.c.l.b16 %v375
        %v504 = vpack.c.b16 %v489, %v488
        %v505 = vpack.c.b16 %v491, %v490
        %v506 = vpack.c.b16 %v493, %v492
        %v507 = vpack.c.b16 %v495, %v494
        %v508 = vpack.c.b16 %v497, %v496
        %v509 = vpack.c.b16 %v499, %v498
        %v510 = vpack.c.b16 %v501, %v500
        %v511 = vpack.c.b16 %v503, %v502
        %520 = vmatpush.bf16.msra.mxu0 %v511
        %521 = vmatpush.bf16.msra.mxu0 %v510
        %522 = vmatpush.bf16.msra.mxu0 %v509
        %523 = vmatpush.bf16.msra.mxu0 %v508
        %524 = vmatpush.bf16.msra.mxu0 %v507
        %525 = vmatpush.bf16.msra.mxu0 %v506
        %526 = vmatpush.bf16.msra.mxu0 %v505
        %527 = vmatpush.bf16.msra.mxu0 %v504
        %528 = vmatmul.bf16.gmra.mxu0 %v440
        %v529 = vpop.f32.mrf.mxu0
        %v530 = vadd.f32 0.0, %v529
        %v531 = vpop.f32.mrf.mxu0
        %v532 = vadd.f32 0.0, %v531
        %533 = vmatmul.bf16.gmra.mxu0 %v441
        %v534 = vpop.f32.mrf.mxu0
        %v535 = vadd.f32 0.0, %v534
        %v536 = vpop.f32.mrf.mxu0
        %v537 = vadd.f32 0.0, %v536
        %538 = vmatmul.bf16.gmra.mxu0 %v442
        %v539 = vpop.f32.mrf.mxu0
        %v540 = vadd.f32 0.0, %v539
        %v541 = vpop.f32.mrf.mxu0
        %v542 = vadd.f32 0.0, %v541
        %543 = vmatmul.bf16.gmra.mxu0 %v443
        %v544 = vpop.f32.mrf.mxu0
        %v545 = vadd.f32 0.0, %v544
        %v546 = vpop.f32.mrf.mxu0
        %v547 = vadd.f32 0.0, %v546
        %548 = vmatmul.bf16.gmra.mxu0 %v444
        %v549 = vpop.f32.mrf.mxu0
        %v550 = vadd.f32 0.0, %v549
        %v551 = vpop.f32.mrf.mxu0
        %v552 = vadd.f32 0.0, %v551
        %553 = vmatmul.bf16.gmra.mxu0 %v445
        %v554 = vpop.f32.mrf.mxu0
        %v555 = vadd.f32 0.0, %v554
        %v556 = vpop.f32.mrf.mxu0
        %v557 = vadd.f32 0.0, %v556
        %558 = vmatmul.bf16.gmra.mxu0 %v446
        %v559 = vpop.f32.mrf.mxu0
        %v560 = vadd.f32 0.0, %v559
        %v561 = vpop.f32.mrf.mxu0
        %v562 = vadd.f32 0.0, %v561
        %563 = vmatmul.bf16.gmra.mxu0 %v447
        %v564 = vpop.f32.mrf.mxu0
        %v565 = vadd.f32 0.0, %v564
        %v566 = vpop.f32.mrf.mxu0
        %v567 = vadd.f32 0.0, %v566
        %568 = vmatmul.bf16.gmra.mxu0 %v448
        %v569 = vpop.f32.mrf.mxu0
        %v570 = vadd.f32 0.0, %v569
        %v571 = vpop.f32.mrf.mxu0
        %v572 = vadd.f32 0.0, %v571
        %573 = vmatmul.bf16.gmra.mxu0 %v449
        %v574 = vpop.f32.mrf.mxu0
        %v575 = vadd.f32 0.0, %v574
        %v576 = vpop.f32.mrf.mxu0
        %v577 = vadd.f32 0.0, %v576
        %578 = vmatmul.bf16.gmra.mxu0 %v450
        %v579 = vpop.f32.mrf.mxu0
        %v580 = vadd.f32 0.0, %v579
        %v581 = vpop.f32.mrf.mxu0
        %v582 = vadd.f32 0.0, %v581
        %583 = vmatmul.bf16.gmra.mxu0 %v451
        %v584 = vpop.f32.mrf.mxu0
        %v585 = vadd.f32 0.0, %v584
        %v586 = vpop.f32.mrf.mxu0
        %v587 = vadd.f32 0.0, %v586
        %588 = vmatmul.bf16.gmra.mxu0 %v452
        %v589 = vpop.f32.mrf.mxu0
        %v590 = vadd.f32 0.0, %v589
        %v591 = vpop.f32.mrf.mxu0
        %v592 = vadd.f32 0.0, %v591
        %593 = vmatmul.bf16.gmra.mxu0 %v453
        %v594 = vpop.f32.mrf.mxu0
        %v595 = vadd.f32 0.0, %v594
        %v596 = vpop.f32.mrf.mxu0
        %v597 = vadd.f32 0.0, %v596
        %598 = vmatmul.bf16.gmra.mxu0 %v454
        %v599 = vpop.f32.mrf.mxu0
        %v600 = vadd.f32 0.0, %v599
        %v601 = vpop.f32.mrf.mxu0
        %v602 = vadd.f32 0.0, %v601
        %603 = vmatmul.bf16.gmra.mxu0 %v455
        %v604 = vpop.f32.mrf.mxu0
        %v605 = vadd.f32 0.0, %v604
        %v606 = vpop.f32.mrf.mxu0
        %v607 = vadd.f32 0.0, %v606
        %608 = vdwg.mxu0
        %v609 = vadd.f32 %v296, %v530
        %v610 = vadd.f32 %v297, %v532
        %v611 = vadd.f32 %v298, %v535
        %v612 = vadd.f32 %v299, %v537
        %v613 = vadd.f32 %v300, %v540
        %v614 = vadd.f32 %v301, %v542
        %v615 = vadd.f32 %v302, %v545
        %v616 = vadd.f32 %v303, %v547
        %v617 = vadd.f32 %v304, %v550
        %v618 = vadd.f32 %v305, %v552
        %v619 = vadd.f32 %v306, %v555
        %v620 = vadd.f32 %v307, %v557
        %v621 = vadd.f32 %v308, %v560
        %v622 = vadd.f32 %v309, %v562
        %v623 = vadd.f32 %v310, %v565
        %v624 = vadd.f32 %v311, %v567
        %v625 = vadd.f32 %v312, %v570
        %v626 = vadd.f32 %v313, %v572
        %v627 = vadd.f32 %v314, %v575
        %v628 = vadd.f32 %v315, %v577
        %v629 = vadd.f32 %v316, %v580
        %v630 = vadd.f32 %v317, %v582
        %v631 = vadd.f32 %v318, %v585
        %v632 = vadd.f32 %v319, %v587
        %v633 = vadd.f32 %v320, %v590
        %v634 = vadd.f32 %v321, %v592
        %v635 = vadd.f32 %v322, %v595
        %v636 = vadd.f32 %v323, %v597
        %v637 = vadd.f32 %v324, %v600
        %v638 = vadd.f32 %v325, %v602
        %v639 = vadd.f32 %v326, %v605
        %v640 = vadd.f32 %v327, %v607
        %641 = vst [vmem:[#allocation2] sm:$0xff] %v609
        %642 = vst [vmem:[#allocation2 + $0x8] sm:$0xff] %v610
        %643 = vst [vmem:[#allocation2 + $0x10] sm:$0xff] %v611
        %644 = vst [vmem:[#allocation2 + $0x18] sm:$0xff] %v612
        %645 = vst [vmem:[#allocation2 + $0x20] sm:$0xff] %v613
        %646 = vst [vmem:[#allocation2 + $0x28] sm:$0xff] %v614
        %647 = vst [vmem:[#allocation2 + $0x30] sm:$0xff] %v615
        %648 = vst [vmem:[#allocation2 + $0x38] sm:$0xff] %v616
        %649 = vst [vmem:[#allocation2 + $0x40] sm:$0xff] %v617
        %650 = vst [vmem:[#allocation2 + $0x48] sm:$0xff] %v618
        %651 = vst [vmem:[#allocation2 + $0x50] sm:$0xff] %v619
        %652 = vst [vmem:[#allocation2 + $0x58] sm:$0xff] %v620
        %653 = vst [vmem:[#allocation2 + $0x60] sm:$0xff] %v621
        %654 = vst [vmem:[#allocation2 + $0x68] sm:$0xff] %v622
        %655 = vst [vmem:[#allocation2 + $0x70] sm:$0xff] %v623
        %656 = vst [vmem:[#allocation2 + $0x78] sm:$0xff] %v624
        %657 = vst [vmem:[#allocation2 + $0x80] sm:$0xff] %v625
        %658 = vst [vmem:[#allocation2 + $0x88] sm:$0xff] %v626
        %659 = vst [vmem:[#allocation2 + $0x90] sm:$0xff] %v627
        %660 = vst [vmem:[#allocation2 + $0x98] sm:$0xff] %v628
        %661 = vst [vmem:[#allocation2 + $0xa0] sm:$0xff] %v629
        %662 = vst [vmem:[#allocation2 + $0xa8] sm:$0xff] %v630
        %663 = vst [vmem:[#allocation2 + $0xb0] sm:$0xff] %v631
        %664 = vst [vmem:[#allocation2 + $0xb8] sm:$0xff] %v632
        %665 = vst [vmem:[#allocation2 + $0xc0] sm:$0xff] %v633
        %666 = vst [vmem:[#allocation2 + $0xc8] sm:$0xff] %v634
        %667 = vst [vmem:[#allocation2 + $0xd0] sm:$0xff] %v635
        %668 = vst [vmem:[#allocation2 + $0xd8] sm:$0xff] %v636
        %669 = vst [vmem:[#allocation2 + $0xe0] sm:$0xff] %v637
        %670 = vst [vmem:[#allocation2 + $0xe8] sm:$0xff] %v638
        %671 = vst [vmem:[#allocation2 + $0xf0] sm:$0xff] %v639
        %672 = vst [vmem:[#allocation2 + $0xf8] sm:$0xff] %v640
        // Predicated region
        $region45: #{tpu_custom_call.1} parent=31 // pred_check
          %p673 = pneg %p260
        $region46: #{tpu_custom_call.1} parent=31 // pred_check_branch
          %675 = sbr.rel (%p673) target = $region48
        $region47: #{tpu_custom_call.1} parent=31 // pred_region
          %v676 = vld [vmem:[#allocation2] sm:$0xff]
          %v677 = vld [vmem:[#allocation2 + $0x8] sm:$0xff]
          %v678 = vld [vmem:[#allocation2 + $0x10] sm:$0xff]
          %v679 = vld [vmem:[#allocation2 + $0x18] sm:$0xff]
          %v680 = vld [vmem:[#allocation2 + $0x20] sm:$0xff]
          %v681 = vld [vmem:[#allocation2 + $0x28] sm:$0xff]
          %v682 = vld [vmem:[#allocation2 + $0x30] sm:$0xff]
          %v683 = vld [vmem:[#allocation2 + $0x38] sm:$0xff]
          %v684 = vld [vmem:[#allocation2 + $0x40] sm:$0xff]
          %v685 = vld [vmem:[#allocation2 + $0x48] sm:$0xff]
          %v686 = vld [vmem:[#allocation2 + $0x50] sm:$0xff]
          %v687 = vld [vmem:[#allocation2 + $0x58] sm:$0xff]
          %v688 = vld [vmem:[#allocation2 + $0x60] sm:$0xff]
          %v689 = vld [vmem:[#allocation2 + $0x68] sm:$0xff]
          %v690 = vld [vmem:[#allocation2 + $0x70] sm:$0xff]
          %v691 = vld [vmem:[#allocation2 + $0x78] sm:$0xff]
          %v692 = vld [vmem:[#allocation2 + $0x80] sm:$0xff]
          %v693 = vld [vmem:[#allocation2 + $0x88] sm:$0xff]
          %v694 = vld [vmem:[#allocation2 + $0x90] sm:$0xff]
          %v695 = vld [vmem:[#allocation2 + $0x98] sm:$0xff]
          %v696 = vld [vmem:[#allocation2 + $0xa0] sm:$0xff]
          %v697 = vld [vmem:[#allocation2 + $0xa8] sm:$0xff]
          %v698 = vld [vmem:[#allocation2 + $0xb0] sm:$0xff]
          %v699 = vld [vmem:[#allocation2 + $0xb8] sm:$0xff]
          %v700 = vld [vmem:[#allocation2 + $0xc0] sm:$0xff]
          %v701 = vld [vmem:[#allocation2 + $0xc8] sm:$0xff]
          %v702 = vld [vmem:[#allocation2 + $0xd0] sm:$0xff]
          %v703 = vld [vmem:[#allocation2 + $0xd8] sm:$0xff]
          %v704 = vld [vmem:[#allocation2 + $0xe0] sm:$0xff]
          %v705 = vld [vmem:[#allocation2 + $0xe8] sm:$0xff]
          %v706 = vld [vmem:[#allocation2 + $0xf0] sm:$0xff]
          %v707 = vld [vmem:[#allocation2 + $0xf8] sm:$0xff]
          %v708 = vld [vmem:[%s258] sm:$0x1]
          %v710 = vperm.slane %v708, 0
          %v712 = vadd.f32 %v676, %v710
          %v713 = vadd.f32 %v677, %v710
          %v714 = vadd.f32 %v678, %v710
          %v715 = vadd.f32 %v679, %v710
          %v716 = vadd.f32 %v680, %v710
          %v717 = vadd.f32 %v681, %v710
          %v718 = vadd.f32 %v682, %v710
          %v719 = vadd.f32 %v683, %v710
          %v720 = vadd.f32 %v684, %v710
          %v721 = vadd.f32 %v685, %v710
          %v722 = vadd.f32 %v686, %v710
          %v723 = vadd.f32 %v687, %v710
          %v724 = vadd.f32 %v688, %v710
          %v725 = vadd.f32 %v689, %v710
          %v726 = vadd.f32 %v690, %v710
          %v727 = vadd.f32 %v691, %v710
          %v728 = vadd.f32 %v692, %v710
          %v729 = vadd.f32 %v693, %v710
          %v730 = vadd.f32 %v694, %v710
          %v731 = vadd.f32 %v695, %v710
          %v732 = vadd.f32 %v696, %v710
          %v733 = vadd.f32 %v697, %v710
          %v734 = vadd.f32 %v698, %v710
          %v735 = vadd.f32 %v699, %v710
          %v736 = vadd.f32 %v700, %v710
          %v737 = vadd.f32 %v701, %v710
          %v738 = vadd.f32 %v702, %v710
          %v739 = vadd.f32 %v703, %v710
          %v740 = vadd.f32 %v704, %v710
          %v741 = vadd.f32 %v705, %v710
          %v742 = vadd.f32 %v706, %v710
          %v743 = vadd.f32 %v707, %v710
          %v744 = vmax.f32 %v712, 0.0
          %v745 = vmax.f32 %v713, 0.0
          %v746 = vmax.f32 %v714, 0.0
          %v747 = vmax.f32 %v715, 0.0
          %v748 = vmax.f32 %v716, 0.0
          %v749 = vmax.f32 %v717, 0.0
          %v750 = vmax.f32 %v718, 0.0
          %v751 = vmax.f32 %v719, 0.0
          %v752 = vmax.f32 %v720, 0.0
          %v753 = vmax.f32 %v721, 0.0
          %v754 = vmax.f32 %v722, 0.0
          %v755 = vmax.f32 %v723, 0.0
          %v756 = vmax.f32 %v724, 0.0
          %v757 = vmax.f32 %v725, 0.0
          %v758 = vmax.f32 %v726, 0.0
          %v759 = vmax.f32 %v727, 0.0
          %v760 = vmax.f32 %v728, 0.0
          %v761 = vmax.f32 %v729, 0.0
          %v762 = vmax.f32 %v730, 0.0
          %v763 = vmax.f32 %v731, 0.0
          %v764 = vmax.f32 %v732, 0.0
          %v765 = vmax.f32 %v733, 0.0
          %v766 = vmax.f32 %v734, 0.0
          %v767 = vmax.f32 %v735, 0.0
          %v768 = vmax.f32 %v736, 0.0
          %v769 = vmax.f32 %v737, 0.0
          %v770 = vmax.f32 %v738, 0.0
          %v771 = vmax.f32 %v739, 0.0
          %v772 = vmax.f32 %v740, 0.0
          %v773 = vmax.f32 %v741, 0.0
          %v774 = vmax.f32 %v742, 0.0
          %v775 = vmax.f32 %v743, 0.0
          %v776 = vpack.c.bf16 %v744, %v744
          %v777 = vpack.c.bf16 %v745, %v745
          %v778 = vpack.c.bf16 %v746, %v746
          %v779 = vpack.c.bf16 %v747, %v747
          %v780 = vpack.c.bf16 %v748, %v748
          %v781 = vpack.c.bf16 %v749, %v749
          %v782 = vpack.c.bf16 %v750, %v750
          %v783 = vpack.c.bf16 %v751, %v751
          %v784 = vpack.c.bf16 %v752, %v752
          %v785 = vpack.c.bf16 %v753, %v753
          %v786 = vpack.c.bf16 %v754, %v754
          %v787 = vpack.c.bf16 %v755, %v755
          %v788 = vpack.c.bf16 %v756, %v756
          %v789 = vpack.c.bf16 %v757, %v757
          %v790 = vpack.c.bf16 %v758, %v758
          %v791 = vpack.c.bf16 %v759, %v759
          %v792 = vpack.c.bf16 %v760, %v760
          %v793 = vpack.c.bf16 %v761, %v761
          %v794 = vpack.c.bf16 %v762, %v762
          %v795 = vpack.c.bf16 %v763, %v763
          %v796 = vpack.c.bf16 %v764, %v764
          %v797 = vpack.c.bf16 %v765, %v765
          %v798 = vpack.c.bf16 %v766, %v766
          %v799 = vpack.c.bf16 %v767, %v767
          %v800 = vpack.c.bf16 %v768, %v768
          %v801 = vpack.c.bf16 %v769, %v769
          %v802 = vpack.c.bf16 %v770, %v770
          %v803 = vpack.c.bf16 %v771, %v771
          %v804 = vpack.c.bf16 %v772, %v772
          %v805 = vpack.c.bf16 %v773, %v773
          %v806 = vpack.c.bf16 %v774, %v774
          %v807 = vpack.c.bf16 %v775, %v775
          %808 = vst [vmem:[%s253] sm:$0xf] %v776
          %809 = vst [vmem:[%s253 + $0x4] sm:$0xf] %v777
          %810 = vst [vmem:[%s253 + $0x8] sm:$0xf] %v778
          %811 = vst [vmem:[%s253 + $0xc] sm:$0xf] %v779
          %812 = vst [vmem:[%s253 + $0x10] sm:$0xf] %v780
          %813 = vst [vmem:[%s253 + $0x14] sm:$0xf] %v781
          %814 = vst [vmem:[%s253 + $0x18] sm:$0xf] %v782
          %815 = vst [vmem:[%s253 + $0x1c] sm:$0xf] %v783
          %816 = vst [vmem:[%s253 + $0x20] sm:$0xf] %v784
          %817 = vst [vmem:[%s253 + $0x24] sm:$0xf] %v785
          %818 = vst [vmem:[%s253 + $0x28] sm:$0xf] %v786
          %819 = vst [vmem:[%s253 + $0x2c] sm:$0xf] %v787
          %820 = vst [vmem:[%s253 + $0x30] sm:$0xf] %v788
          %821 = vst [vmem:[%s253 + $0x34] sm:$0xf] %v789
          %822 = vst [vmem:[%s253 + $0x38] sm:$0xf] %v790
          %823 = vst [vmem:[%s253 + $0x3c] sm:$0xf] %v791
          %824 = vst [vmem:[%s253 + $0x40] sm:$0xf] %v792
          %825 = vst [vmem:[%s253 + $0x44] sm:$0xf] %v793
          %826 = vst [vmem:[%s253 + $0x48] sm:$0xf] %v794
          %827 = vst [vmem:[%s253 + $0x4c] sm:$0xf] %v795
          %828 = vst [vmem:[%s253 + $0x50] sm:$0xf] %v796
          %829 = vst [vmem:[%s253 + $0x54] sm:$0xf] %v797
          %830 = vst [vmem:[%s253 + $0x58] sm:$0xf] %v798
          %831 = vst [vmem:[%s253 + $0x5c] sm:$0xf] %v799
          %832 = vst [vmem:[%s253 + $0x60] sm:$0xf] %v800
          %833 = vst [vmem:[%s253 + $0x64] sm:$0xf] %v801
          %834 = vst [vmem:[%s253 + $0x68] sm:$0xf] %v802
          %835 = vst [vmem:[%s253 + $0x6c] sm:$0xf] %v803
          %836 = vst [vmem:[%s253 + $0x70] sm:$0xf] %v804
          %837 = vst [vmem:[%s253 + $0x74] sm:$0xf] %v805
          %838 = vst [vmem:[%s253 + $0x78] sm:$0xf] %v806
          %839 = vst [vmem:[%s253 + $0x7c] sm:$0xf] %v807
        $region48: #{tpu_custom_call.1} parent=31 // pred_fallthru
          _
        %s840 = sand.u32 %s132, 1
        %s841 = scalar_lea.sflag [#allocation5], %s840
        %s842 = sand.u32 %s132, 1
        %s843 = smul.addr %s842, 128
        %s844 = scalar_lea.vmem [#allocation8], %s843
        // Predicated region
        $region49: #{tpu_custom_call.1} parent=31 // pred_check
          %p845 = pneg %p142
        $region50: #{tpu_custom_call.1} parent=31 // pred_check_branch
          %847 = sbr.rel (%p845) target = $region52
        $region51: #{tpu_custom_call.1} parent=31 // pred_region
          %s848 = smul.u32 32, %s26
          %850 = vsyncadd %s841, 0
          %s851 = sadd.s32 %s27, %s848
          %s852 = smul.addr %s851, 4
          %s853 = scalar_lea.hbm %s3, %s852
          %s854 = sshll.u32 %s844, 4
          %s855 = int_to_ptr.vmem [resolvable:$true] %s854
          %s856 = sshll.u32 %s853, 4
          %s857 = int_to_ptr.hbm [resolvable:$true] %s856
          %862 = dma.vmem_to_hbm [thread:$0]  %s855, 2048, %s857, %s841, 64, 64, 4
        $region52: #{tpu_custom_call.1} parent=31 // pred_fallthru
          _
      $region32: #{tpu_custom_call.1} parent=5 // pred_fallthru
        _
      %p863 = scmp.le.s32.totalorder 2, %s16
      // Predicated region
      $region53: #{tpu_custom_call.1} parent=5 // pred_check
        %p864 = pneg %p863
      $region54: #{tpu_custom_call.1} parent=5 // pred_check_branch
        %866 = sbr.rel (%p864) target = $region56
      $region55: #{tpu_custom_call.1} parent=5 // pred_region
        %s867 = ssub.s32 %s16, 2
        // Predicated region
        $region57: #{tpu_custom_call.1} parent=55 // pred_check
          %p868 = pneg %p148
        $region58: #{tpu_custom_call.1} parent=55 // pred_check_branch
          %870 = sbr.rel (%p868) target = $region60
        $region59: #{tpu_custom_call.1} parent=55 // pred_region
          %s871 = sand.u32 %s133, 1
          %s872 = scalar_lea.sflag [#allocation5], %s871
          %s873 = sand.u32 %s133, 1
          %s874 = smul.addr %s873, 128
          %s875 = scalar_lea.vmem [#allocation8], %s874
          %877 = dma.done %s872, 2048
        $region60: #{tpu_custom_call.1} parent=55 // pred_fallthru
          _
      $region56: #{tpu_custom_call.1} parent=5 // pred_fallthru
        _
    $region6: #{tpu_custom_call.1} parent=1 // loop_footer
      %s20 = sadd.s32 1, %s16
    $region7: #{tpu_custom_call.1} parent=1 // loop_footer_branch
      %15 = sbr.rel target = $region3
    $region8: #{tpu_custom_call.1} parent=1 // loop_exit
      _
    %878 = vsyncpa [#allocation4], 1
    %s879 = scalar_lea.sflag [#allocation4], 1
    %880 = vsyncpa %s879, 1
    %881 = vsyncpa [#allocation7], 1
    %882 = vsyncpa [#allocation5], 1
    %s883 = scalar_lea.sflag [#allocation5], 1
    %884 = vsyncpa %s883, 1

</llo_original>
